<compile_context>
chip_gen: v7x
topology: tpu7x:2x2x1
jax: 0.10.0
libtpu: 0.0.40
codegen_flags: <defaults>
</compile_context>

<pallas_src>
import functools

import jax
import jax.numpy as jnp
from jax import lax
from jax.experimental import pallas as pl
from jax.experimental.pallas import tpu as pltpu


def categorical_kernel(x_ref, w_ref, b_ref, lp_ref, mode_ref, ent_ref):
    x = x_ref[...]                       # (TB, K) f32
    w = w_ref[...]                       # (N, K)  f32  (PyTorch layout)
    b = b_ref[...]                       # (1, N)  f32
    n = w.shape[0]

    # Linear layer on the MXU: contract K of x with K of w directly
    # (no wrapper-side weight transpose needed).
    raw = lax.dot_general(x, w, (((1,), (1,)), ((), ())),
                          preferred_element_type=jnp.float32) + b   # (TB, N)

    # Numerically stable softmax / log-softmax.
    m = jnp.max(raw, axis=-1, keepdims=True)
    e = jnp.exp(raw - m)
    s = jnp.sum(e, axis=-1, keepdims=True)
    lse = m + jnp.log(s)
    norm_logits = raw - lse              # torch Categorical .logits
    probs = e / s                        # torch Categorical .probs

    # entropy = -(p * log p).sum(-1); reuses probs / norm_logits (no extra EUP).
    ent_ref[...] = -jnp.sum(probs * norm_logits, axis=-1, keepdims=True)

    # mode = argmax(probs) = argmax(raw logits); first-max tie-break like
    # torch.argmax.  Built from raw logits via iota/compare/min (no exp dep).
    col = lax.broadcasted_iota(jnp.int32, raw.shape, 1)
    mode_ref[...] = jnp.min(jnp.where(raw == m, col, jnp.int32(n)),
                            axis=-1, keepdims=True)

    # Pack [normalized logits | probs] into one lane-denser slab.
    lp_ref[:, 0:n] = norm_logits
    lp_ref[:, n:2 * n] = probs


@functools.partial(jax.jit, static_argnames=("tb",))
def categorical_forward(x, weight, bias, *, tb=128):
    """x: (B, num_inputs); weight: (num_outputs, num_inputs) (PyTorch layout);
    bias: (num_outputs,).  Returns (logits, probs, mode, entropy)."""
    B, K = x.shape
    N = weight.shape[0]

    x = x.astype(jnp.float32)
    w = weight.astype(jnp.float32)                  # stays (N, K): no transpose
    b2 = bias.reshape(1, N).astype(jnp.float32)

    # Tile the batch axis so the kernel software-pipelines; pad if uneven.
    if B > tb:
        TB = tb
        pad = (-B) % TB
        if pad:
            x = jnp.pad(x, ((0, pad), (0, 0)))
    else:
        TB = B
    Bp = x.shape[0]
    grid = (Bp // TB,)

    out_shapes = (
        jax.ShapeDtypeStruct((Bp, 2 * N), jnp.float32),  # [logits | probs] slab
        jax.ShapeDtypeStruct((Bp, 1), jnp.int32),        # mode (argmax index)
        jax.ShapeDtypeStruct((Bp, 1), jnp.float32),      # entropy
    )

    cost = pl.CostEstimate(
        flops=2 * Bp * K * N + 6 * Bp * N,
        transcendentals=Bp * (N + 1),                    # exp/elem + log/row
        bytes_accessed=4 * (Bp * K + N * K + N + Bp * (2 * N + 2)),
    )

    lp, mode, ent = pl.pallas_call(
        categorical_kernel,
        out_shape=out_shapes,
        grid=grid,
        in_specs=[
            pl.BlockSpec((TB, K), lambda i: (i, 0)),
            pl.BlockSpec((N, K), lambda i: (0, 0)),   # weight resident across steps
            pl.BlockSpec((1, N), lambda i: (0, 0)),   # bias resident across steps
        ],
        out_specs=(
            pl.BlockSpec((TB, 2 * N), lambda i: (i, 0)),
            pl.BlockSpec((TB, 1), lambda i: (i, 0)),
            pl.BlockSpec((TB, 1), lambda i: (i, 0)),
        ),
        compiler_params=pltpu.CompilerParams(
            dimension_semantics=("parallel",)),
        cost_estimate=cost,
    )(x, w, b2)

    logits = lp[:B, :N]
    probs = lp[:B, N:]
    return logits, probs, mode[:B], ent[:B, 0]


if __name__ == "__main__":
    num_inputs, num_outputs, batch = 32, 16, 256   # 2 grid steps at TB=128

    key = jax.random.PRNGKey(0)
    k_w, k_x = jax.random.split(key)

    # Mirrors the module init: orthogonal weight with gain=0.01, zero bias.
    weight = jax.nn.initializers.orthogonal(scale=0.01)(
        k_w, (num_outputs, num_inputs), jnp.float32)
    bias = jnp.zeros((num_outputs,), jnp.float32)

    x = jax.random.normal(k_x, (batch, num_inputs), jnp.float32)

    logits, probs, mode, entropy = categorical_forward(x, weight, bias)
    jax.block_until_ready((logits, probs, mode, entropy))

    # Reference check against plain JAX.
    ref_raw = x @ weight.T + bias
    ref_logits = jax.nn.log_softmax(ref_raw, axis=-1)
    ref_probs = jax.nn.softmax(ref_raw, axis=-1)
    ref_mode = jnp.argmax(ref_raw, axis=-1)[:, None].astype(jnp.int32)
    ref_ent = -jnp.sum(ref_probs * ref_logits, axis=-1)

    assert jnp.allclose(logits, ref_logits, atol=1e-5), "logits mismatch"
    assert jnp.allclose(probs, ref_probs, atol=1e-5), "probs mismatch"
    assert jnp.array_equal(mode, ref_mode), "mode mismatch"
    assert jnp.allclose(entropy, ref_ent, atol=1e-5), "entropy mismatch"

    print("KERNEL_OK")
</pallas_src>

<mosaic_0001>
module attributes {stable_mosaic.version = 11 : i64} {
  func.func @categorical_kernel(%arg0: i32, %arg1: memref<128x32xf32, #tpu.memory_space<vmem>>, %arg2: memref<16x32xf32, #tpu.memory_space<vmem>>, %arg3: memref<1x16xf32, #tpu.memory_space<vmem>>, %arg4: memref<128x32xf32, #tpu.memory_space<vmem>>, %arg5: memref<128x1xi32, #tpu.memory_space<vmem>>, %arg6: memref<128x1xf32, #tpu.memory_space<vmem>>) attributes {dimension_semantics = [#tpu.dimension_semantics<parallel>], iteration_bounds = array<i64: 2>, scalar_prefetch = 0 : i64, scratch_operands = 0 : i64, tpu.core_type = #tpu.core_type<tc>, window_params = [{transform_indices = @transform_0, window_bounds = array<i64: 128, 32>}, {pipeline_mode = #tpu.pipeline_mode<synchronous>, transform_indices = @transform_1, window_bounds = array<i64: 16, 32>}, {pipeline_mode = #tpu.pipeline_mode<synchronous>, transform_indices = @transform_2, window_bounds = array<i64: 1, 16>}, {transform_indices = @transform_3, window_bounds = array<i64: 128, 32>}, {transform_indices = @transform_4, window_bounds = array<i64: 128, 1>}, {transform_indices = @transform_5, window_bounds = array<i64: 128, 1>}]} {
    %c0 = arith.constant 0 : index
    %c0_0 = arith.constant 0 : index
    %0 = vector.load %arg1[%c0, %c0_0] : memref<128x32xf32, #tpu.memory_space<vmem>>, vector<128x32xf32>
    %c0_1 = arith.constant 0 : index
    %c0_2 = arith.constant 0 : index
    %1 = vector.load %arg2[%c0_1, %c0_2] : memref<16x32xf32, #tpu.memory_space<vmem>>, vector<16x32xf32>
    %c0_3 = arith.constant 0 : index
    %c0_4 = arith.constant 0 : index
    %2 = vector.load %arg3[%c0_3, %c0_4] : memref<1x16xf32, #tpu.memory_space<vmem>>, vector<1x16xf32>
    %cst = arith.constant dense<0.000000e+00> : vector<128x16xf32>
    %3 = tpu.matmul %0, %1, %cst {dimension_numbers = #tpu.dot_dimension_numbers<[1], [1], [0], [0], [0, 0, 1, 0], [], []>} : vector<128x32xf32>, vector<16x32xf32>, vector<128x16xf32> -> vector<128x16xf32>
    %4 = vector.broadcast %2 : vector<1x16xf32> to vector<128x16xf32>
    %5 = arith.addf %3, %4 : vector<128x16xf32>
    %cst_5 = arith.constant dense<0xFF800000> : vector<128xf32>
    %6 = vector.multi_reduction <maximumf>, %5, %cst_5 [1] : vector<128x16xf32> to vector<128xf32>
    %7 = vector.shape_cast %6 : vector<128xf32> to vector<128x1xf32>
    %8 = vector.broadcast %7 : vector<128x1xf32> to vector<128x16xf32>
    %9 = arith.subf %5, %8 : vector<128x16xf32>
    %10 = math.exp %9 : vector<128x16xf32>
    %cst_6 = arith.constant dense<0.000000e+00> : vector<128xf32>
    %11 = vector.multi_reduction <add>, %10, %cst_6 [1] : vector<128x16xf32> to vector<128xf32>
    %12 = vector.shape_cast %11 : vector<128xf32> to vector<128x1xf32>
    %13 = math.log %12 : vector<128x1xf32>
    %14 = arith.addf %7, %13 : vector<128x1xf32>
    %15 = vector.broadcast %14 : vector<128x1xf32> to vector<128x16xf32>
    %16 = arith.subf %5, %15 : vector<128x16xf32>
    %17 = vector.broadcast %12 : vector<128x1xf32> to vector<128x16xf32>
    %18 = arith.divf %10, %17 : vector<128x16xf32>
    %19 = arith.mulf %18, %16 : vector<128x16xf32>
    %cst_7 = arith.constant dense<0.000000e+00> : vector<128xf32>
    %20 = vector.multi_reduction <add>, %19, %cst_7 [1] : vector<128x16xf32> to vector<128xf32>
    %21 = vector.shape_cast %20 : vector<128xf32> to vector<128x1xf32>
    %cst_8 = arith.constant 0.000000e+00 : f32
    %22 = vector.broadcast %cst_8 : f32 to vector<128x1xf32>
    %23 = arith.subf %22, %21 : vector<128x1xf32>
    %c0_9 = arith.constant 0 : index
    %c0_10 = arith.constant 0 : index
    %24 = vector.load %arg6[%c0_9, %c0_10] : memref<128x1xf32, #tpu.memory_space<vmem>>, vector<128x1xf32>
    tpu.vector_store %arg6[%c0_9, %c0_10], %23 {strides = array<i32>} : memref<128x1xf32, #tpu.memory_space<vmem>>, vector<128x1xf32>,
    %25 = tpu.iota {dimensions = array<i32: 1>} : vector<128x16xi32>
    %26 = vector.broadcast %7 : vector<128x1xf32> to vector<128x16xf32>
    %27 = arith.cmpf oeq, %5, %26 : vector<128x16xf32>
    %c16_i32 = arith.constant 16 : i32
    %28 = vector.broadcast %c16_i32 : i32 to vector<128x16xi32>
    %29 = arith.select %27, %25, %28 : vector<128x16xi1>, vector<128x16xi32>
    %cst_11 = arith.constant dense<2147483647> : vector<128xi32>
    %30 = vector.multi_reduction <minsi>, %29, %cst_11 [1] : vector<128x16xi32> to vector<128xi32>
    %31 = vector.shape_cast %30 : vector<128xi32> to vector<128x1xi32>
    %c0_12 = arith.constant 0 : index
    %c0_13 = arith.constant 0 : index
    %32 = vector.load %arg5[%c0_12, %c0_13] : memref<128x1xi32, #tpu.memory_space<vmem>>, vector<128x1xi32>
    tpu.vector_store %arg5[%c0_12, %c0_13], %31 {strides = array<i32>} : memref<128x1xi32, #tpu.memory_space<vmem>>, vector<128x1xi32>,
    %c0_14 = arith.constant 0 : index
    %c0_15 = arith.constant 0 : index
    %33 = vector.load %arg4[%c0_14, %c0_15] : memref<128x32xf32, #tpu.memory_space<vmem>>, vector<128x16xf32>
    tpu.vector_store %arg4[%c0_14, %c0_15], %16 {strides = array<i32>} : memref<128x32xf32, #tpu.memory_space<vmem>>, vector<128x16xf32>,
    %c0_16 = arith.constant 0 : index
    %c16 = arith.constant 16 : index
    %34 = vector.load %arg4[%c0_16, %c16] : memref<128x32xf32, #tpu.memory_space<vmem>>, vector<128x16xf32>
    tpu.vector_store %arg4[%c0_16, %c16], %18 {strides = array<i32>} : memref<128x32xf32, #tpu.memory_space<vmem>>, vector<128x16xf32>,
    return
  }
  func.func @transform_0(%arg0: i32) -> (i32, i32) {
    %c0_i32 = arith.constant 0 : i32
    %c0_i32_0 = arith.constant 0 : i32
    return %arg0, %c0_i32 : i32, i32
  }
  func.func @transform_1(%arg0: i32) -> (i32, i32) {
    %c0_i32 = arith.constant 0 : i32
    %c0_i32_0 = arith.constant 0 : i32
    %c0_i32_1 = arith.constant 0 : i32
    return %c0_i32, %c0_i32_0 : i32, i32
  }
  func.func @transform_2(%arg0: i32) -> (i32, i32) {
    %c0_i32 = arith.constant 0 : i32
    %c0_i32_0 = arith.constant 0 : i32
    %c0_i32_1 = arith.constant 0 : i32
    return %c0_i32, %c0_i32_0 : i32, i32
  }
  func.func @transform_3(%arg0: i32) -> (i32, i32) {
    %c0_i32 = arith.constant 0 : i32
    %c0_i32_0 = arith.constant 0 : i32
    return %arg0, %c0_i32 : i32, i32
  }
  func.func @transform_4(%arg0: i32) -> (i32, i32) {
    %c0_i32 = arith.constant 0 : i32
    %c0_i32_0 = arith.constant 0 : i32
    return %arg0, %c0_i32 : i32, i32
  }
  func.func @transform_5(%arg0: i32) -> (i32, i32) {
    %c0_i32 = arith.constant 0 : i32
    %c0_i32_0 = arith.constant 0 : i32
    return %arg0, %c0_i32 : i32, i32
  }
}

</mosaic_0001>

<llo_original>
// kernel: categorical_forward.1
$region0: #{categorical_forward.1}
  #allocation0 [shape = 'u32[]', space=smem, size = 0x4, offset = 0x4, fixed_abs, tag = 'smem constant byte address 0x4 - core index']
  #allocation1 [shape = 'u32[144,128]{1,0:T(1,128)}', space=vmem, size = 0x12000, scoped, tag = 'internal scratch']
  %s0 = inlined_call_operand.vmem [shape: f32[256,32], index: 0, kind: input, shape index: {}]
  %s1 = inlined_call_operand.vmem [shape: f32[16,32], index: 1, kind: input, shape index: {}]
  %s2 = inlined_call_operand.vmem [shape: f32[1,16], index: 2, kind: input, shape index: {}]
  %s3 = inlined_call_operand.vmem [shape: f32[256,32], index: 3, kind: output, shape index: {0}]
  %s4 = inlined_call_operand.vmem [shape: s32[256,1], index: 4, kind: output, shape index: {1}]
  %s5 = inlined_call_operand.vmem [shape: f32[256,1], index: 5, kind: output, shape index: {2}]
  %6 = xla_tuple %s3, %s4, %s5
  %s7 = sld [smem:[#allocation0]]
  $region61: #{categorical_forward.1} parent=0
    _
  %s9 = ssub.s32 1, %s7
  %s10 = scalar_select 0, %s9, %s7
  loop: start=0, step=1, limit=4
  $region2: #{categorical_forward.1} parent=0 // loop_pre_header
    _
  $region3: #{categorical_forward.1} parent=0 // loop_header
    %s12 = sphi 0, %s16
    %p13 = scmp.ge.s32.totalorder %s12, 4
    %s22 = sphi 0, %s24
    %s25 = sphi 0, %s22
    %s26 = sphi 0, %s25
    %s42 = sphi 0, %s26
    %s46 = sphi 0, %s46
    %s48 = sphi 0, %s46
    %s49 = sphi 0, %s48
    %s63 = sphi 0, %s49
    %s67 = sphi 0, %s67
    %s69 = sphi 0, %s67
    %s70 = sphi 0, %s69
    %s84 = sphi 0, %s70
    %s90 = sphi 0, %s92
    %s93 = sphi 0, %s90
    %s94 = sphi 0, %s93
    %s110 = sphi 0, %s94
    %s116 = sphi 0, %s118
    %s119 = sphi 0, %s116
    %s120 = sphi 0, %s119
    %s136 = sphi 0, %s120
    %s142 = sphi 0, %s144
    %s145 = sphi 0, %s142
    %s146 = sphi 0, %s145
    %s162 = sphi 0, %s146
  $region4: #{categorical_forward.1} parent=0 // loop_header_branch
    %15 = sbr.rel (%p13) target = $region8
  $region5: #{categorical_forward.1} parent=0 // loop_body
    %s17 = ssub.s32 %s12, 1
    %s18 = ssub.s32 %s12, 2
    %s19 = sadd.s32 %s12, 1
    %s20 = ssub.s32 %s12, %s19
    %p21 = scmp.eq.s32.totalorder %s20, 0
    %s23 = sadd.s32 %s22, 1
    %s24 = scalar_select %p21, %s22, %s23
    %p27 = pneg %p21
    %p28 = scmp.eq.s32.totalorder %s12, 1
    %p29 = por %p27, %p28
    %p30 = scmp.ne.s32.totalorder %s22, %s25
    %p31 = scmp.eq.s32.totalorder %s12, 0
    %p32 = por %p30, %p31
    %p33 = scmp.ne.s32.totalorder %s22, %s25
    %p34 = scmp.eq.s32.totalorder %s17, 1
    %p35 = por %p33, %p34
    %p36 = scmp.ne.s32.totalorder %s25, %s26
    %p37 = scmp.eq.s32.totalorder %s17, 0
    %p38 = por %p36, %p37
    %p39 = scmp.ne.s32.totalorder %s25, %s26
    %p40 = scmp.eq.s32.totalorder %s18, 1
    %p41 = por %p39, %p40
    %p43 = scmp.ne.s32.totalorder %s26, %s42
    %p44 = scmp.eq.s32.totalorder %s18, 0
    %p45 = por %p43, %p44
    %s47 = sadd.s32 %s46, 1
    %p50 = scmp.eq.s32.totalorder %s12, 1
    %p51 = scmp.ne.s32.totalorder %s46, %s48
    %p52 = scmp.eq.s32.totalorder %s12, 0
    %p53 = por %p51, %p52
    %p54 = scmp.ne.s32.totalorder %s46, %s48
    %p55 = scmp.eq.s32.totalorder %s17, 1
    %p56 = por %p54, %p55
    %p57 = scmp.ne.s32.totalorder %s48, %s49
    %p58 = scmp.eq.s32.totalorder %s17, 0
    %p59 = por %p57, %p58
    %p60 = scmp.ne.s32.totalorder %s48, %s49
    %p61 = scmp.eq.s32.totalorder %s18, 1
    %p62 = por %p60, %p61
    %p64 = scmp.ne.s32.totalorder %s49, %s63
    %p65 = scmp.eq.s32.totalorder %s18, 0
    %p66 = por %p64, %p65
    %s68 = sadd.s32 %s67, 1
    %p71 = scmp.eq.s32.totalorder %s12, 1
    %p72 = scmp.ne.s32.totalorder %s67, %s69
    %p73 = scmp.eq.s32.totalorder %s12, 0
    %p74 = por %p72, %p73
    %p75 = scmp.ne.s32.totalorder %s67, %s69
    %p76 = scmp.eq.s32.totalorder %s17, 1
    %p77 = por %p75, %p76
    %p78 = scmp.ne.s32.totalorder %s69, %s70
    %p79 = scmp.eq.s32.totalorder %s17, 0
    %p80 = por %p78, %p79
    %p81 = scmp.ne.s32.totalorder %s69, %s70
    %p82 = scmp.eq.s32.totalorder %s18, 1
    %p83 = por %p81, %p82
    %p85 = scmp.ne.s32.totalorder %s70, %s84
    %p86 = scmp.eq.s32.totalorder %s18, 0
    %p87 = por %p85, %p86
    %s88 = ssub.s32 %s12, %s19
    %p89 = scmp.eq.s32.totalorder %s88, 0
    %s91 = sadd.s32 %s90, 1
    %s92 = scalar_select %p89, %s90, %s91
    %p95 = pneg %p89
    %p96 = scmp.eq.s32.totalorder %s12, 1
    %p97 = por %p95, %p96
    %p98 = scmp.ne.s32.totalorder %s90, %s93
    %p99 = scmp.eq.s32.totalorder %s12, 0
    %p100 = por %p98, %p99
    %p101 = scmp.ne.s32.totalorder %s90, %s93
    %p102 = scmp.eq.s32.totalorder %s17, 1
    %p103 = por %p101, %p102
    %p104 = scmp.ne.s32.totalorder %s93, %s94
    %p105 = scmp.eq.s32.totalorder %s17, 0
    %p106 = por %p104, %p105
    %p107 = scmp.ne.s32.totalorder %s93, %s94
    %p108 = scmp.eq.s32.totalorder %s18, 1
    %p109 = por %p107, %p108
    %p111 = scmp.ne.s32.totalorder %s94, %s110
    %p112 = scmp.eq.s32.totalorder %s18, 0
    %p113 = por %p111, %p112
    %s114 = ssub.s32 %s12, %s19
    %p115 = scmp.eq.s32.totalorder %s114, 0
    %s117 = sadd.s32 %s116, 1
    %s118 = scalar_select %p115, %s116, %s117
    %p121 = pneg %p115
    %p122 = scmp.eq.s32.totalorder %s12, 1
    %p123 = por %p121, %p122
    %p124 = scmp.ne.s32.totalorder %s116, %s119
    %p125 = scmp.eq.s32.totalorder %s12, 0
    %p126 = por %p124, %p125
    %p127 = scmp.ne.s32.totalorder %s116, %s119
    %p128 = scmp.eq.s32.totalorder %s17, 1
    %p129 = por %p127, %p128
    %p130 = scmp.ne.s32.totalorder %s119, %s120
    %p131 = scmp.eq.s32.totalorder %s17, 0
    %p132 = por %p130, %p131
    %p133 = scmp.ne.s32.totalorder %s119, %s120
    %p134 = scmp.eq.s32.totalorder %s18, 1
    %p135 = por %p133, %p134
    %p137 = scmp.ne.s32.totalorder %s120, %s136
    %p138 = scmp.eq.s32.totalorder %s18, 0
    %p139 = por %p137, %p138
    %s140 = ssub.s32 %s12, %s19
    %p141 = scmp.eq.s32.totalorder %s140, 0
    %s143 = sadd.s32 %s142, 1
    %s144 = scalar_select %p141, %s142, %s143
    %p147 = pneg %p141
    %p148 = scmp.eq.s32.totalorder %s12, 1
    %p149 = por %p147, %p148
    %p150 = scmp.ne.s32.totalorder %s142, %s145
    %p151 = scmp.eq.s32.totalorder %s12, 0
    %p152 = por %p150, %p151
    %p153 = scmp.ne.s32.totalorder %s142, %s145
    %p154 = scmp.eq.s32.totalorder %s17, 1
    %p155 = por %p153, %p154
    %p156 = scmp.ne.s32.totalorder %s145, %s146
    %p157 = scmp.eq.s32.totalorder %s17, 0
    %p158 = por %p156, %p157
    %p159 = scmp.ne.s32.totalorder %s145, %s146
    %p160 = scmp.eq.s32.totalorder %s18, 1
    %p161 = por %p159, %p160
    %p163 = scmp.ne.s32.totalorder %s146, %s162
    %p164 = scmp.eq.s32.totalorder %s18, 0
    %p165 = por %p163, %p164
    %p166 = scmp.le.s32.totalorder 1, %s12
    %p167 = scmp.lt.s32.totalorder %s12, 3
    %p168 = pnand %p166, %p167
    %p169 = pneg %p168
    // Predicated region
    $region9: #{categorical_forward.1} parent=5 // pred_check
      _
    $region10: #{categorical_forward.1} parent=5 // pred_check_branch
      %171 = sbr.rel (%p168) target = $region12
    $region11: #{categorical_forward.1} parent=5 // pred_region
      %s172 = ssub.s32 %s12, 1
      // Predicated region
      $region13: #{categorical_forward.1} parent=11 // pred_check
        %p173 = pneg %p59
      $region14: #{categorical_forward.1} parent=11 // pred_check_branch
        %175 = sbr.rel (%p173) target = $region16
      $region15: #{categorical_forward.1} parent=11 // pred_region
        _
      $region16: #{categorical_forward.1} parent=11 // pred_fallthru
        _
      // Predicated region
      $region17: #{categorical_forward.1} parent=11 // pred_check
        %p176 = pneg %p80
      $region18: #{categorical_forward.1} parent=11 // pred_check_branch
        %178 = sbr.rel (%p176) target = $region20
      $region19: #{categorical_forward.1} parent=11 // pred_region
        _
      $region20: #{categorical_forward.1} parent=11 // pred_fallthru
        _
    $region12: #{categorical_forward.1} parent=5 // pred_fallthru
      _
    %p179 = scmp.lt.s32.totalorder %s12, 2
    // Predicated region
    $region21: #{categorical_forward.1} parent=5 // pred_check
      %p180 = pneg %p179
    $region22: #{categorical_forward.1} parent=5 // pred_check_branch
      %182 = sbr.rel (%p180) target = $region24
    $region23: #{categorical_forward.1} parent=5 // pred_region
      // Predicated region
      $region25: #{categorical_forward.1} parent=23 // pred_check
        %p183 = pneg %p32
      $region26: #{categorical_forward.1} parent=23 // pred_check_branch
        %185 = sbr.rel (%p183) target = $region28
      $region27: #{categorical_forward.1} parent=23 // pred_region
        %s186 = smul.u32 16, %s12
        %p187 = scmp.lt.s32.totalorder %s186, 31
        %s188 = scalar_select %p187, %s186, 31
        %s189 = smul.addr %s188, 8
        %s190 = scalar_lea.vmem %s0, %s189
        %s191 = smul.u32 16, %s12
      $region28: #{categorical_forward.1} parent=23 // pred_fallthru
        _
    $region24: #{categorical_forward.1} parent=5 // pred_fallthru
      _
    %p192 = scmp.le.s32.totalorder 1, %s12
    %p193 = scmp.lt.s32.totalorder %s12, 3
    %p194 = pnand %p192, %p193
    %p195 = pneg %p194
    // Predicated region
    $region29: #{categorical_forward.1} parent=5 // pred_check
      _
    $region30: #{categorical_forward.1} parent=5 // pred_check_branch
      %197 = sbr.rel (%p194) target = $region32
    $region31: #{categorical_forward.1} parent=5 // pred_region
      %s198 = ssub.s32 %s12, 1
      %s199 = smul.u32 16, %s17
      %p200 = scmp.lt.s32.totalorder %s199, 31
      %s201 = scalar_select %p200, %s199, 31
      %s202 = smul.addr %s201, 8
      %s203 = scalar_lea.vmem %s0, %s202
      %p204 = pneg %p38
      %p205 = pneg %p35
      %p206 = pneg %p59
      %p207 = pneg %p56
      %p208 = pneg %p80
      %p209 = pneg %p77
      %p210 = pneg %p106
      %p211 = pneg %p103
      %s212 = smul.u32 16, %s17
      %p213 = scmp.lt.s32.totalorder %s212, 31
      %s214 = scalar_select %p213, %s212, 31
      %s215 = smul.addr %s214, 8
      %s216 = scalar_lea.vmem %s3, %s215
      %p217 = pneg %p132
      %p218 = pneg %p129
      %s219 = smul.u32 16, %s17
      %p220 = scmp.lt.s32.totalorder %s219, 31
      %s221 = scalar_select %p220, %s219, 31
      %s222 = smul.addr %s221, 8
      %s223 = scalar_lea.vmem %s4, %s222
      %p224 = pneg %p158
      %p225 = pneg %p155
      %s226 = smul.u32 16, %s17
      %p227 = scmp.lt.s32.totalorder %s226, 31
      %s228 = scalar_select %p227, %s226, 31
      %s229 = smul.addr %s228, 8
      %s230 = scalar_lea.vmem %s5, %s229
      %s231 = smul.u32 16, %s17
      %p232 = scmp.lt.s32.totalorder %s231, 31
      %s233 = scalar_select %p232, %s231, 31
      %s234 = smul.addr %s233, 8
      %s235 = scalar_lea.vmem %s0, %s234
      %s236 = smul.u32 16, %s17
      %s237 = smul.u32 16, %s17
      %p238 = scmp.lt.s32.totalorder %s237, 31
      %s239 = scalar_select %p238, %s237, 31
      %s240 = smul.addr %s239, 8
      %s241 = scalar_lea.vmem %s3, %s240
      %s242 = smul.u32 16, %s17
      %s243 = smul.u32 16, %s17
      %p244 = scmp.lt.s32.totalorder %s243, 31
      %s245 = scalar_select %p244, %s243, 31
      %s246 = smul.addr %s245, 8
      %s247 = scalar_lea.vmem %s4, %s246
      %s248 = smul.u32 16, %s17
      %s249 = smul.u32 16, %s17
      %p250 = scmp.lt.s32.totalorder %s249, 31
      %s251 = scalar_select %p250, %s249, 31
      %s252 = smul.addr %s251, 8
      %s253 = scalar_lea.vmem %s5, %s252
      %s254 = smul.u32 16, %s17
      %v255 = vld [vmem:[%s235] sm:$0xff]
      %v256 = vld [vmem:[%s235 + $0x8] sm:$0xff]
      %v257 = vld [vmem:[%s235 + $0x10] sm:$0xff]
      %v258 = vld [vmem:[%s235 + $0x18] sm:$0xff]
      %v259 = vld [vmem:[%s235 + $0x20] sm:$0xff]
      %v260 = vld [vmem:[%s235 + $0x28] sm:$0xff]
      %v261 = vld [vmem:[%s235 + $0x30] sm:$0xff]
      %v262 = vld [vmem:[%s235 + $0x38] sm:$0xff]
      %v263 = vld [vmem:[%s235 + $0x40] sm:$0xff]
      %v264 = vld [vmem:[%s235 + $0x48] sm:$0xff]
      %v265 = vld [vmem:[%s235 + $0x50] sm:$0xff]
      %v266 = vld [vmem:[%s235 + $0x58] sm:$0xff]
      %v267 = vld [vmem:[%s235 + $0x60] sm:$0xff]
      %v268 = vld [vmem:[%s235 + $0x68] sm:$0xff]
      %v269 = vld [vmem:[%s235 + $0x70] sm:$0xff]
      %v270 = vld [vmem:[%s235 + $0x78] sm:$0xff]
      %v271 = vld [vmem:[%s1] sm:$0xff]
      %v272 = vld [vmem:[%s1 + $0x8] sm:$0xff]
      %v273 = vld [vmem:[%s2] sm:$0x1]
      %v275 = vlaneseq
      %v276 = vshrl.u32 %v275, 7
      %v277 = vsub.s32 0, %v276
      %v278 = vrot.slane %v273, %v277
      %vm280 = vcmask 261120
      %v282 = vsel %vm280, %v255, 0
      %v285 = vsel %vm280, %v256, 0
      %v288 = vsel %vm280, %v257, 0
      %v291 = vsel %vm280, %v258, 0
      %v294 = vsel %vm280, %v259, 0
      %v297 = vsel %vm280, %v260, 0
      %v300 = vsel %vm280, %v261, 0
      %v303 = vsel %vm280, %v262, 0
      %v306 = vsel %vm280, %v263, 0
      %v309 = vsel %vm280, %v264, 0
      %v312 = vsel %vm280, %v265, 0
      %v315 = vsel %vm280, %v266, 0
      %v318 = vsel %vm280, %v267, 0
      %v321 = vsel %vm280, %v268, 0
      %v324 = vsel %vm280, %v269, 0
      %v327 = vsel %vm280, %v270, 0
      %v330 = vsel %vm280, %v271, 0
      %v333 = vsel %vm280, %v272, 0
      %335 = vmatprep.subr.mxu0 0.0
      %336 = vmatpush1.xpose.msra.mxu0 %v330
      %337 = vmatprep.subr.mxu0 0.0
      %338 = vmatpush1.xpose.msra.mxu0 %v333
      %339 = vmatprep.subr.mxu0 0.0
      %340 = vmatpush1.xpose.msra.mxu0 0.0
      %341 = vmatprep.subr.mxu0 0.0
      %342 = vmatpush1.xpose.msra.mxu0 0.0
      %343 = vmatprep.subr.mxu0 0.0
      %344 = vmatpush1.xpose.msra.mxu0 0.0
      %345 = vmatprep.subr.mxu0 0.0
      %346 = vmatpush1.xpose.msra.mxu0 0.0
      %347 = vmatprep.subr.mxu0 0.0
      %348 = vmatpush1.xpose.msra.mxu0 0.0
      %349 = vmatprep.subr.mxu0 0.0
      %350 = vmatpush1.xpose.msra.mxu0 0.0
      %351 = vmatprep.subr.mxu0 0.0
      %352 = vmatpush1.xpose.msra.mxu0 0.0
      %353 = vmatprep.subr.mxu0 0.0
      %354 = vmatpush1.xpose.msra.mxu0 0.0
      %355 = vmatprep.subr.mxu0 0.0
      %356 = vmatpush1.xpose.msra.mxu0 0.0
      %357 = vmatprep.subr.mxu0 0.0
      %358 = vmatpush1.xpose.msra.mxu0 0.0
      %359 = vmatprep.subr.mxu0 0.0
      %360 = vmatpush1.xpose.msra.mxu0 0.0
      %361 = vmatprep.subr.mxu0 0.0
      %362 = vmatpush1.xpose.msra.mxu0 0.0
      %363 = vmatprep.subr.mxu0 0.0
      %364 = vmatpush1.xpose.msra.mxu0 0.0
      %365 = vmatprep.subr.mxu0 0.0
      %366 = vmatpush1.xpose.msra.mxu0 0.0
      %367 = vmatprep.subr.mxu0 0.0
      %368 = vmatpush1.xpose.msra.mxu0 0.0
      %369 = vmatprep.subr.mxu0 0.0
      %370 = vmatpush1.xpose.msra.mxu0 0.0
      %371 = vmatprep.subr.mxu0 0.0
      %372 = vmatpush1.xpose.msra.mxu0 0.0
      %373 = vmatprep.subr.mxu0 0.0
      %374 = vmatpush1.xpose.msra.mxu0 0.0
      %375 = vmatprep.subr.mxu0 0.0
      %376 = vmatpush1.xpose.msra.mxu0 0.0
      %377 = vmatprep.subr.mxu0 0.0
      %378 = vmatpush1.xpose.msra.mxu0 0.0
      %379 = vmatprep.subr.mxu0 0.0
      %380 = vmatpush1.xpose.msra.mxu0 0.0
      %381 = vmatprep.subr.mxu0 0.0
      %382 = vmatpush1.xpose.msra.mxu0 0.0
      %383 = vmatprep.subr.mxu0 0.0
      %384 = vmatpush1.xpose.msra.mxu0 0.0
      %385 = vmatprep.subr.mxu0 0.0
      %386 = vmatpush1.xpose.msra.mxu0 0.0
      %387 = vmatprep.subr.mxu0 0.0
      %388 = vmatpush1.xpose.msra.mxu0 0.0
      %389 = vmatprep.subr.mxu0 0.0
      %390 = vmatpush1.xpose.msra.mxu0 0.0
      %391 = vmatprep.subr.mxu0 0.0
      %392 = vmatpush1.xpose.msra.mxu0 0.0
      %393 = vmatprep.subr.mxu0 0.0
      %394 = vmatpush1.xpose.msra.mxu0 0.0
      %395 = vmatprep.subr.mxu0 0.0
      %396 = vmatpush1.xpose.msra.mxu0 0.0
      %397 = vmatprep.subr.mxu0 0.0
      %398 = vmatpush1.xpose.msra.mxu0 0.0
      %399 = vmatprep.mubr.f32.mxu0 0.0
      %400 = vmatmul.mubr.f32.gmra.mrb[0].mxu0 %v282
      %v401 = vpop.f32.mrb[0].mxu0
      %v402 = vadd.f32 %v278, %v401
      %v403 = vpop.f32.mrb[0].mxu0
      %404 = vmatprep.mubr.f32.mxu0 0.0
      %405 = vmatmul.mubr.f32.gmra.mrb[0].mxu0 %v285
      %v406 = vpop.f32.mrb[0].mxu0
      %v407 = vadd.f32 %v278, %v406
      %v408 = vpop.f32.mrb[0].mxu0
      %409 = vmatprep.mubr.f32.mxu0 0.0
      %410 = vmatmul.mubr.f32.gmra.mrb[0].mxu0 %v288
      %v411 = vpop.f32.mrb[0].mxu0
      %v412 = vadd.f32 %v278, %v411
      %v413 = vpop.f32.mrb[0].mxu0
      %414 = vmatprep.mubr.f32.mxu0 0.0
      %415 = vmatmul.mubr.f32.gmra.mrb[0].mxu0 %v291
      %v416 = vpop.f32.mrb[0].mxu0
      %v417 = vadd.f32 %v278, %v416
      %v418 = vpop.f32.mrb[0].mxu0
      %419 = vmatprep.mubr.f32.mxu0 0.0
      %420 = vmatmul.mubr.f32.gmra.mrb[0].mxu0 %v294
      %v421 = vpop.f32.mrb[0].mxu0
      %v422 = vadd.f32 %v278, %v421
      %v423 = vpop.f32.mrb[0].mxu0
      %424 = vmatprep.mubr.f32.mxu0 0.0
      %425 = vmatmul.mubr.f32.gmra.mrb[0].mxu0 %v297
      %v426 = vpop.f32.mrb[0].mxu0
      %v427 = vadd.f32 %v278, %v426
      %v428 = vpop.f32.mrb[0].mxu0
      %429 = vmatprep.mubr.f32.mxu0 0.0
      %430 = vmatmul.mubr.f32.gmra.mrb[0].mxu0 %v300
      %v431 = vpop.f32.mrb[0].mxu0
      %v432 = vadd.f32 %v278, %v431
      %v433 = vpop.f32.mrb[0].mxu0
      %434 = vmatprep.mubr.f32.mxu0 0.0
      %435 = vmatmul.mubr.f32.gmra.mrb[0].mxu0 %v303
      %v436 = vpop.f32.mrb[0].mxu0
      %v437 = vadd.f32 %v278, %v436
      %v438 = vpop.f32.mrb[0].mxu0
      %439 = vmatprep.mubr.f32.mxu0 0.0
      %440 = vmatmul.mubr.f32.gmra.mrb[0].mxu0 %v306
      %v441 = vpop.f32.mrb[0].mxu0
      %v442 = vadd.f32 %v278, %v441
      %v443 = vpop.f32.mrb[0].mxu0
      %444 = vmatprep.mubr.f32.mxu0 0.0
      %445 = vmatmul.mubr.f32.gmra.mrb[0].mxu0 %v309
      %v446 = vpop.f32.mrb[0].mxu0
      %v447 = vadd.f32 %v278, %v446
      %v448 = vpop.f32.mrb[0].mxu0
      %449 = vmatprep.mubr.f32.mxu0 0.0
      %450 = vmatmul.mubr.f32.gmra.mrb[0].mxu0 %v312
      %v451 = vpop.f32.mrb[0].mxu0
      %v452 = vadd.f32 %v278, %v451
      %v453 = vpop.f32.mrb[0].mxu0
      %454 = vmatprep.mubr.f32.mxu0 0.0
      %455 = vmatmul.mubr.f32.gmra.mrb[0].mxu0 %v315
      %v456 = vpop.f32.mrb[0].mxu0
      %v457 = vadd.f32 %v278, %v456
      %v458 = vpop.f32.mrb[0].mxu0
      %459 = vmatprep.mubr.f32.mxu0 0.0
      %460 = vmatmul.mubr.f32.gmra.mrb[0].mxu0 %v318
      %v461 = vpop.f32.mrb[0].mxu0
      %v462 = vadd.f32 %v278, %v461
      %v463 = vpop.f32.mrb[0].mxu0
      %464 = vmatprep.mubr.f32.mxu0 0.0
      %465 = vmatmul.mubr.f32.gmra.mrb[0].mxu0 %v321
      %v466 = vpop.f32.mrb[0].mxu0
      %v467 = vadd.f32 %v278, %v466
      %v468 = vpop.f32.mrb[0].mxu0
      %469 = vmatprep.mubr.f32.mxu0 0.0
      %470 = vmatmul.mubr.f32.gmra.mrb[0].mxu0 %v324
      %v471 = vpop.f32.mrb[0].mxu0
      %v472 = vadd.f32 %v278, %v471
      %v473 = vpop.f32.mrb[0].mxu0
      %474 = vmatprep.mubr.f32.mxu0 0.0
      %475 = vmatmul.mubr.f32.gmra.mrb[0].mxu0 %v327
      %v476 = vpop.f32.mrb[0].mxu0
      %v477 = vadd.f32 %v278, %v476
      %v478 = vpop.f32.mrb[0].mxu0
      %479 = vdwg.mxu0
      %vm480 = vcmask 130048
      %v481 = vsel %vm480, %v402, -inf
      %482 = vmax.xlane.f32.xlu0 %v481
      %v483 = vpop.xlane.xlu0 %482
      %v484 = vsel %vm480, %v407, -inf
      %485 = vmax.xlane.f32.xlu0 %v484
      %v486 = vpop.xlane.xlu0 %485
      %v487 = vsel %vm480, %v412, -inf
      %488 = vmax.xlane.f32.xlu0 %v487
      %v489 = vpop.xlane.xlu0 %488
      %v490 = vsel %vm480, %v417, -inf
      %491 = vmax.xlane.f32.xlu0 %v490
      %v492 = vpop.xlane.xlu0 %491
      %v493 = vsel %vm480, %v422, -inf
      %494 = vmax.xlane.f32.xlu0 %v493
      %v495 = vpop.xlane.xlu0 %494
      %v496 = vsel %vm480, %v427, -inf
      %497 = vmax.xlane.f32.xlu0 %v496
      %v498 = vpop.xlane.xlu0 %497
      %v499 = vsel %vm480, %v432, -inf
      %500 = vmax.xlane.f32.xlu0 %v499
      %v501 = vpop.xlane.xlu0 %500
      %v502 = vsel %vm480, %v437, -inf
      %503 = vmax.xlane.f32.xlu0 %v502
      %v504 = vpop.xlane.xlu0 %503
      %v505 = vsel %vm480, %v442, -inf
      %506 = vmax.xlane.f32.xlu0 %v505
      %v507 = vpop.xlane.xlu0 %506
      %v508 = vsel %vm480, %v447, -inf
      %509 = vmax.xlane.f32.xlu0 %v508
      %v510 = vpop.xlane.xlu0 %509
      %v511 = vsel %vm480, %v452, -inf
      %512 = vmax.xlane.f32.xlu0 %v511
      %v513 = vpop.xlane.xlu0 %512
      %v514 = vsel %vm480, %v457, -inf
      %515 = vmax.xlane.f32.xlu0 %v514
      %v516 = vpop.xlane.xlu0 %515
      %v517 = vsel %vm480, %v462, -inf
      %518 = vmax.xlane.f32.xlu0 %v517
      %v519 = vpop.xlane.xlu0 %518
      %v520 = vsel %vm480, %v467, -inf
      %521 = vmax.xlane.f32.xlu0 %v520
      %v522 = vpop.xlane.xlu0 %521
      %v523 = vsel %vm480, %v472, -inf
      %524 = vmax.xlane.f32.xlu0 %v523
      %v525 = vpop.xlane.xlu0 %524
      %v526 = vsel %vm480, %v477, -inf
      %527 = vmax.xlane.f32.xlu0 %v526
      %v528 = vpop.xlane.xlu0 %527
      %v529 = vsub.f32 %v402, %v483
      %v530 = vsub.f32 %v407, %v486
      %v531 = vsub.f32 %v412, %v489
      %v532 = vsub.f32 %v417, %v492
      %v533 = vsub.f32 %v422, %v495
      %v534 = vsub.f32 %v427, %v498
      %v535 = vsub.f32 %v432, %v501
      %v536 = vsub.f32 %v437, %v504
      %v537 = vsub.f32 %v442, %v507
      %v538 = vsub.f32 %v447, %v510
      %v539 = vsub.f32 %v452, %v513
      %v540 = vsub.f32 %v457, %v516
      %v541 = vsub.f32 %v462, %v519
      %v542 = vsub.f32 %v467, %v522
      %v543 = vsub.f32 %v472, %v525
      %v544 = vsub.f32 %v477, %v528
      %v545 = vmul.f32 %v529, 1.442695
      %v546 = vpow.pop %v545
      %v547 = vmul.f32 %v530, 1.442695
      %v548 = vpow.pop %v547
      %v549 = vmul.f32 %v531, 1.442695
      %v550 = vpow.pop %v549
      %v551 = vmul.f32 %v532, 1.442695
      %v552 = vpow.pop %v551
      %v553 = vmul.f32 %v533, 1.442695
      %v554 = vpow.pop %v553
      %v555 = vmul.f32 %v534, 1.442695
      %v556 = vpow.pop %v555
      %v557 = vmul.f32 %v535, 1.442695
      %v558 = vpow.pop %v557
      %v559 = vmul.f32 %v536, 1.442695
      %v560 = vpow.pop %v559
      %v561 = vmul.f32 %v537, 1.442695
      %v562 = vpow.pop %v561
      %v563 = vmul.f32 %v538, 1.442695
      %v564 = vpow.pop %v563
      %v565 = vmul.f32 %v539, 1.442695
      %v566 = vpow.pop %v565
      %v567 = vmul.f32 %v540, 1.442695
      %v568 = vpow.pop %v567
      %v569 = vmul.f32 %v541, 1.442695
      %v570 = vpow.pop %v569
      %v571 = vmul.f32 %v542, 1.442695
      %v572 = vpow.pop %v571
      %v573 = vmul.f32 %v543, 1.442695
      %v574 = vpow.pop %v573
      %v575 = vmul.f32 %v544, 1.442695
      %v576 = vpow.pop %v575
      %v577 = vsel %vm480, %v546, 0.0
      %578 = vadd.xlane.f32.xlu0 %v577
      %v579 = vpop.xlane.xlu0 %578
      %v580 = vsel %vm480, %v548, 0.0
      %581 = vadd.xlane.f32.xlu0 %v580
      %v582 = vpop.xlane.xlu0 %581
      %v583 = vsel %vm480, %v550, 0.0
      %584 = vadd.xlane.f32.xlu0 %v583
      %v585 = vpop.xlane.xlu0 %584
      %v586 = vsel %vm480, %v552, 0.0
      %587 = vadd.xlane.f32.xlu0 %v586
      %v588 = vpop.xlane.xlu0 %587
      %v589 = vsel %vm480, %v554, 0.0
      %590 = vadd.xlane.f32.xlu0 %v589
      %v591 = vpop.xlane.xlu0 %590
      %v592 = vsel %vm480, %v556, 0.0
      %593 = vadd.xlane.f32.xlu0 %v592
      %v594 = vpop.xlane.xlu0 %593
      %v595 = vsel %vm480, %v558, 0.0
      %596 = vadd.xlane.f32.xlu0 %v595
      %v597 = vpop.xlane.xlu0 %596
      %v598 = vsel %vm480, %v560, 0.0
      %599 = vadd.xlane.f32.xlu0 %v598
      %v600 = vpop.xlane.xlu0 %599
      %v601 = vsel %vm480, %v562, 0.0
      %602 = vadd.xlane.f32.xlu0 %v601
      %v603 = vpop.xlane.xlu0 %602
      %v604 = vsel %vm480, %v564, 0.0
      %605 = vadd.xlane.f32.xlu0 %v604
      %v606 = vpop.xlane.xlu0 %605
      %v607 = vsel %vm480, %v566, 0.0
      %608 = vadd.xlane.f32.xlu0 %v607
      %v609 = vpop.xlane.xlu0 %608
      %v610 = vsel %vm480, %v568, 0.0
      %611 = vadd.xlane.f32.xlu0 %v610
      %v612 = vpop.xlane.xlu0 %611
      %v613 = vsel %vm480, %v570, 0.0
      %614 = vadd.xlane.f32.xlu0 %v613
      %v615 = vpop.xlane.xlu0 %614
      %v616 = vsel %vm480, %v572, 0.0
      %617 = vadd.xlane.f32.xlu0 %v616
      %v618 = vpop.xlane.xlu0 %617
      %v619 = vsel %vm480, %v574, 0.0
      %620 = vadd.xlane.f32.xlu0 %v619
      %v621 = vpop.xlane.xlu0 %620
      %v622 = vsel %vm480, %v576, 0.0
      %623 = vadd.xlane.f32.xlu0 %v622
      %v624 = vpop.xlane.xlu0 %623
      %v625 = vlog2.pop %v579
      %v626 = vmul.f32 %v625, 0.6931472
      %v627 = vlog2.pop %v582
      %v628 = vmul.f32 %v627, 0.6931472
      %v629 = vlog2.pop %v585
      %v630 = vmul.f32 %v629, 0.6931472
      %v631 = vlog2.pop %v588
      %v632 = vmul.f32 %v631, 0.6931472
      %v633 = vlog2.pop %v591
      %v634 = vmul.f32 %v633, 0.6931472
      %v635 = vlog2.pop %v594
      %v636 = vmul.f32 %v635, 0.6931472
      %v637 = vlog2.pop %v597
      %v638 = vmul.f32 %v637, 0.6931472
      %v639 = vlog2.pop %v600
      %v640 = vmul.f32 %v639, 0.6931472
      %v641 = vlog2.pop %v603
      %v642 = vmul.f32 %v641, 0.6931472
      %v643 = vlog2.pop %v606
      %v644 = vmul.f32 %v643, 0.6931472
      %v645 = vlog2.pop %v609
      %v646 = vmul.f32 %v645, 0.6931472
      %v647 = vlog2.pop %v612
      %v648 = vmul.f32 %v647, 0.6931472
      %v649 = vlog2.pop %v615
      %v650 = vmul.f32 %v649, 0.6931472
      %v651 = vlog2.pop %v618
      %v652 = vmul.f32 %v651, 0.6931472
      %v653 = vlog2.pop %v621
      %v654 = vmul.f32 %v653, 0.6931472
      %v655 = vlog2.pop %v624
      %v656 = vmul.f32 %v655, 0.6931472
      %v657 = vadd.f32 %v483, %v626
      %v658 = vadd.f32 %v486, %v628
      %v659 = vadd.f32 %v489, %v630
      %v660 = vadd.f32 %v492, %v632
      %v661 = vadd.f32 %v495, %v634
      %v662 = vadd.f32 %v498, %v636
      %v663 = vadd.f32 %v501, %v638
      %v664 = vadd.f32 %v504, %v640
      %v665 = vadd.f32 %v507, %v642
      %v666 = vadd.f32 %v510, %v644
      %v667 = vadd.f32 %v513, %v646
      %v668 = vadd.f32 %v516, %v648
      %v669 = vadd.f32 %v519, %v650
      %v670 = vadd.f32 %v522, %v652
      %v671 = vadd.f32 %v525, %v654
      %v672 = vadd.f32 %v528, %v656
      %v673 = vsub.f32 %v402, %v657
      %v674 = vsub.f32 %v407, %v658
      %v675 = vsub.f32 %v412, %v659
      %v676 = vsub.f32 %v417, %v660
      %v677 = vsub.f32 %v422, %v661
      %v678 = vsub.f32 %v427, %v662
      %v679 = vsub.f32 %v432, %v663
      %v680 = vsub.f32 %v437, %v664
      %v681 = vsub.f32 %v442, %v665
      %v682 = vsub.f32 %v447, %v666
      %v683 = vsub.f32 %v452, %v667
      %v684 = vsub.f32 %v457, %v668
      %v685 = vsub.f32 %v462, %v669
      %v686 = vsub.f32 %v467, %v670
      %v687 = vsub.f32 %v472, %v671
      %v688 = vsub.f32 %v477, %v672
      %v689 = vrcp.pop %v579
      %v690 = vmul.f32 %v546, %v689
      %v691 = vrcp.pop %v582
      %v692 = vmul.f32 %v548, %v691
      %v693 = vrcp.pop %v585
      %v694 = vmul.f32 %v550, %v693
      %v695 = vrcp.pop %v588
      %v696 = vmul.f32 %v552, %v695
      %v697 = vrcp.pop %v591
      %v698 = vmul.f32 %v554, %v697
      %v699 = vrcp.pop %v594
      %v700 = vmul.f32 %v556, %v699
      %v701 = vrcp.pop %v597
      %v702 = vmul.f32 %v558, %v701
      %v703 = vrcp.pop %v600
      %v704 = vmul.f32 %v560, %v703
      %v705 = vrcp.pop %v603
      %v706 = vmul.f32 %v562, %v705
      %v707 = vrcp.pop %v606
      %v708 = vmul.f32 %v564, %v707
      %v709 = vrcp.pop %v609
      %v710 = vmul.f32 %v566, %v709
      %v711 = vrcp.pop %v612
      %v712 = vmul.f32 %v568, %v711
      %v713 = vrcp.pop %v615
      %v714 = vmul.f32 %v570, %v713
      %v715 = vrcp.pop %v618
      %v716 = vmul.f32 %v572, %v715
      %v717 = vrcp.pop %v621
      %v718 = vmul.f32 %v574, %v717
      %v719 = vrcp.pop %v624
      %v720 = vmul.f32 %v576, %v719
      %v721 = vmul.f32 %v690, %v673
      %v722 = vmul.f32 %v692, %v674
      %v723 = vmul.f32 %v694, %v675
      %v724 = vmul.f32 %v696, %v676
      %v725 = vmul.f32 %v698, %v677
      %v726 = vmul.f32 %v700, %v678
      %v727 = vmul.f32 %v702, %v679
      %v728 = vmul.f32 %v704, %v680
      %v729 = vmul.f32 %v706, %v681
      %v730 = vmul.f32 %v708, %v682
      %v731 = vmul.f32 %v710, %v683
      %v732 = vmul.f32 %v712, %v684
      %v733 = vmul.f32 %v714, %v685
      %v734 = vmul.f32 %v716, %v686
      %v735 = vmul.f32 %v718, %v687
      %v736 = vmul.f32 %v720, %v688
      %v737 = vsel %vm480, %v721, 0.0
      %738 = vadd.xlane.f32.xlu0 %v737
      %v739 = vpop.xlane.xlu0 %738
      %v740 = vsel %vm480, %v722, 0.0
      %741 = vadd.xlane.f32.xlu0 %v740
      %v742 = vpop.xlane.xlu0 %741
      %v743 = vsel %vm480, %v723, 0.0
      %744 = vadd.xlane.f32.xlu0 %v743
      %v745 = vpop.xlane.xlu0 %744
      %v746 = vsel %vm480, %v724, 0.0
      %747 = vadd.xlane.f32.xlu0 %v746
      %v748 = vpop.xlane.xlu0 %747
      %v749 = vsel %vm480, %v725, 0.0
      %750 = vadd.xlane.f32.xlu0 %v749
      %v751 = vpop.xlane.xlu0 %750
      %v752 = vsel %vm480, %v726, 0.0
      %753 = vadd.xlane.f32.xlu0 %v752
      %v754 = vpop.xlane.xlu0 %753
      %v755 = vsel %vm480, %v727, 0.0
      %756 = vadd.xlane.f32.xlu0 %v755
      %v757 = vpop.xlane.xlu0 %756
      %v758 = vsel %vm480, %v728, 0.0
      %759 = vadd.xlane.f32.xlu0 %v758
      %v760 = vpop.xlane.xlu0 %759
      %v761 = vsel %vm480, %v729, 0.0
      %762 = vadd.xlane.f32.xlu0 %v761
      %v763 = vpop.xlane.xlu0 %762
      %v764 = vsel %vm480, %v730, 0.0
      %765 = vadd.xlane.f32.xlu0 %v764
      %v766 = vpop.xlane.xlu0 %765
      %v767 = vsel %vm480, %v731, 0.0
      %768 = vadd.xlane.f32.xlu0 %v767
      %v769 = vpop.xlane.xlu0 %768
      %v770 = vsel %vm480, %v732, 0.0
      %771 = vadd.xlane.f32.xlu0 %v770
      %v772 = vpop.xlane.xlu0 %771
      %v773 = vsel %vm480, %v733, 0.0
      %774 = vadd.xlane.f32.xlu0 %v773
      %v775 = vpop.xlane.xlu0 %774
      %v776 = vsel %vm480, %v734, 0.0
      %777 = vadd.xlane.f32.xlu0 %v776
      %v778 = vpop.xlane.xlu0 %777
      %v779 = vsel %vm480, %v735, 0.0
      %780 = vadd.xlane.f32.xlu0 %v779
      %v781 = vpop.xlane.xlu0 %780
      %v782 = vsel %vm480, %v736, 0.0
      %783 = vadd.xlane.f32.xlu0 %v782
      %v784 = vpop.xlane.xlu0 %783
      %v785 = vsub.f32 0.0, %v739
      %v786 = vsub.f32 0.0, %v742
      %v787 = vsub.f32 0.0, %v745
      %v788 = vsub.f32 0.0, %v748
      %v789 = vsub.f32 0.0, %v751
      %v790 = vsub.f32 0.0, %v754
      %v791 = vsub.f32 0.0, %v757
      %v792 = vsub.f32 0.0, %v760
      %v793 = vsub.f32 0.0, %v763
      %v794 = vsub.f32 0.0, %v766
      %v795 = vsub.f32 0.0, %v769
      %v796 = vsub.f32 0.0, %v772
      %v797 = vsub.f32 0.0, %v775
      %v798 = vsub.f32 0.0, %v778
      %v799 = vsub.f32 0.0, %v781
      %v800 = vsub.f32 0.0, %v784
      %vm801 = vcmask 7168
      %802 = vst.msk [vmem:[%s253] sm:$0xff] %vm801, %v785
      %803 = vst.msk [vmem:[%s253 + $0x8] sm:$0xff] %vm801, %v786
      %804 = vst.msk [vmem:[%s253 + $0x10] sm:$0xff] %vm801, %v787
      %805 = vst.msk [vmem:[%s253 + $0x18] sm:$0xff] %vm801, %v788
      %806 = vst.msk [vmem:[%s253 + $0x20] sm:$0xff] %vm801, %v789
      %807 = vst.msk [vmem:[%s253 + $0x28] sm:$0xff] %vm801, %v790
      %808 = vst.msk [vmem:[%s253 + $0x30] sm:$0xff] %vm801, %v791
      %809 = vst.msk [vmem:[%s253 + $0x38] sm:$0xff] %vm801, %v792
      %810 = vst.msk [vmem:[%s253 + $0x40] sm:$0xff] %vm801, %v793
      %811 = vst.msk [vmem:[%s253 + $0x48] sm:$0xff] %vm801, %v794
      %812 = vst.msk [vmem:[%s253 + $0x50] sm:$0xff] %vm801, %v795
      %813 = vst.msk [vmem:[%s253 + $0x58] sm:$0xff] %vm801, %v796
      %814 = vst.msk [vmem:[%s253 + $0x60] sm:$0xff] %vm801, %v797
      %815 = vst.msk [vmem:[%s253 + $0x68] sm:$0xff] %vm801, %v798
      %816 = vst.msk [vmem:[%s253 + $0x70] sm:$0xff] %vm801, %v799
      %817 = vst.msk [vmem:[%s253 + $0x78] sm:$0xff] %vm801, %v800
      %v818 = vlaneseq
      %v819 = vand.u32 %v818, 127
      %vm820 = vcmp.eq.f32.partialorder %v402, %v483
      %vm821 = vcmp.eq.f32.partialorder %v407, %v486
      %vm822 = vcmp.eq.f32.partialorder %v412, %v489
      %vm823 = vcmp.eq.f32.partialorder %v417, %v492
      %vm824 = vcmp.eq.f32.partialorder %v422, %v495
      %vm825 = vcmp.eq.f32.partialorder %v427, %v498
      %vm826 = vcmp.eq.f32.partialorder %v432, %v501
      %vm827 = vcmp.eq.f32.partialorder %v437, %v504
      %vm828 = vcmp.eq.f32.partialorder %v442, %v507
      %vm829 = vcmp.eq.f32.partialorder %v447, %v510
      %vm830 = vcmp.eq.f32.partialorder %v452, %v513
      %vm831 = vcmp.eq.f32.partialorder %v457, %v516
      %vm832 = vcmp.eq.f32.partialorder %v462, %v519
      %vm833 = vcmp.eq.f32.partialorder %v467, %v522
      %vm834 = vcmp.eq.f32.partialorder %v472, %v525
      %vm835 = vcmp.eq.f32.partialorder %v477, %v528
      %v836 = vsel %vm820, %v819, 16
      %v837 = vsel %vm821, %v819, 16
      %v838 = vsel %vm822, %v819, 16
      %v839 = vsel %vm823, %v819, 16
      %v840 = vsel %vm824, %v819, 16
      %v841 = vsel %vm825, %v819, 16
      %v842 = vsel %vm826, %v819, 16
      %v843 = vsel %vm827, %v819, 16
      %v844 = vsel %vm828, %v819, 16
      %v845 = vsel %vm829, %v819, 16
      %v846 = vsel %vm830, %v819, 16
      %v847 = vsel %vm831, %v819, 16
      %v848 = vsel %vm832, %v819, 16
      %v849 = vsel %vm833, %v819, 16
      %v850 = vsel %vm834, %v819, 16
      %v851 = vsel %vm835, %v819, 16
      %v852 = vsel %vm480, %v836, 2147483647
      %v853 = vand.u32 %v852, 65535
      %v854 = vshra.s32 %v852, 16
      %v855 = vcvt.s32.f32 %v853
      %v856 = vcvt.s32.f32 %v854
      %857 = vmin.xlane.f32.xlu0 %v856
      %v858 = vpop.xlane.xlu0 %857
      %vm859 = vcmp.eq.f32.partialorder %v856, %v858
      %v860 = vsel %vm859, %v855, inf
      %861 = vmin.xlane.f32.xlu0 %v860
      %v862 = vpop.xlane.xlu0 %861
      %v863 = vcvt.f32.s32 %v862
      %v864 = vcvt.f32.s32 %v858
      %v865 = vshll.u32 %v864, 16
      %v866 = vadd.s32 %v865, %v863
      %v867 = vsel %vm480, %v837, 2147483647
      %v868 = vand.u32 %v867, 65535
      %v869 = vshra.s32 %v867, 16
      %v870 = vcvt.s32.f32 %v868
      %v871 = vcvt.s32.f32 %v869
      %872 = vmin.xlane.f32.xlu0 %v871
      %v873 = vpop.xlane.xlu0 %872
      %vm874 = vcmp.eq.f32.partialorder %v871, %v873
      %v875 = vsel %vm874, %v870, inf
      %876 = vmin.xlane.f32.xlu0 %v875
      %v877 = vpop.xlane.xlu0 %876
      %v878 = vcvt.f32.s32 %v877
      %v879 = vcvt.f32.s32 %v873
      %v880 = vshll.u32 %v879, 16
      %v881 = vadd.s32 %v880, %v878
      %v882 = vsel %vm480, %v838, 2147483647
      %v883 = vand.u32 %v882, 65535
      %v884 = vshra.s32 %v882, 16
      %v885 = vcvt.s32.f32 %v883
      %v886 = vcvt.s32.f32 %v884
      %887 = vmin.xlane.f32.xlu0 %v886
      %v888 = vpop.xlane.xlu0 %887
      %vm889 = vcmp.eq.f32.partialorder %v886, %v888
      %v890 = vsel %vm889, %v885, inf
      %891 = vmin.xlane.f32.xlu0 %v890
      %v892 = vpop.xlane.xlu0 %891
      %v893 = vcvt.f32.s32 %v892
      %v894 = vcvt.f32.s32 %v888
      %v895 = vshll.u32 %v894, 16
      %v896 = vadd.s32 %v895, %v893
      %v897 = vsel %vm480, %v839, 2147483647
      %v898 = vand.u32 %v897, 65535
      %v899 = vshra.s32 %v897, 16
      %v900 = vcvt.s32.f32 %v898
      %v901 = vcvt.s32.f32 %v899
      %902 = vmin.xlane.f32.xlu0 %v901
      %v903 = vpop.xlane.xlu0 %902
      %vm904 = vcmp.eq.f32.partialorder %v901, %v903
      %v905 = vsel %vm904, %v900, inf
      %906 = vmin.xlane.f32.xlu0 %v905
      %v907 = vpop.xlane.xlu0 %906
      %v908 = vcvt.f32.s32 %v907
      %v909 = vcvt.f32.s32 %v903
      %v910 = vshll.u32 %v909, 16
      %v911 = vadd.s32 %v910, %v908
      %v912 = vsel %vm480, %v840, 2147483647
      %v913 = vand.u32 %v912, 65535
      %v914 = vshra.s32 %v912, 16
      %v915 = vcvt.s32.f32 %v913
      %v916 = vcvt.s32.f32 %v914
      %917 = vmin.xlane.f32.xlu0 %v916
      %v918 = vpop.xlane.xlu0 %917
      %vm919 = vcmp.eq.f32.partialorder %v916, %v918
      %v920 = vsel %vm919, %v915, inf
      %921 = vmin.xlane.f32.xlu0 %v920
      %v922 = vpop.xlane.xlu0 %921
      %v923 = vcvt.f32.s32 %v922
      %v924 = vcvt.f32.s32 %v918
      %v925 = vshll.u32 %v924, 16
      %v926 = vadd.s32 %v925, %v923
      %v927 = vsel %vm480, %v841, 2147483647
      %v928 = vand.u32 %v927, 65535
      %v929 = vshra.s32 %v927, 16
      %v930 = vcvt.s32.f32 %v928
      %v931 = vcvt.s32.f32 %v929
      %932 = vmin.xlane.f32.xlu0 %v931
      %v933 = vpop.xlane.xlu0 %932
      %vm934 = vcmp.eq.f32.partialorder %v931, %v933
      %v935 = vsel %vm934, %v930, inf
      %936 = vmin.xlane.f32.xlu0 %v935
      %v937 = vpop.xlane.xlu0 %936
      %v938 = vcvt.f32.s32 %v937
      %v939 = vcvt.f32.s32 %v933
      %v940 = vshll.u32 %v939, 16
      %v941 = vadd.s32 %v940, %v938
      %v942 = vsel %vm480, %v842, 2147483647
      %v943 = vand.u32 %v942, 65535
      %v944 = vshra.s32 %v942, 16
      %v945 = vcvt.s32.f32 %v943
      %v946 = vcvt.s32.f32 %v944
      %947 = vmin.xlane.f32.xlu0 %v946
      %v948 = vpop.xlane.xlu0 %947
      %vm949 = vcmp.eq.f32.partialorder %v946, %v948
      %v950 = vsel %vm949, %v945, inf
      %951 = vmin.xlane.f32.xlu0 %v950
      %v952 = vpop.xlane.xlu0 %951
      %v953 = vcvt.f32.s32 %v952
      %v954 = vcvt.f32.s32 %v948
      %v955 = vshll.u32 %v954, 16
      %v956 = vadd.s32 %v955, %v953
      %v957 = vsel %vm480, %v843, 2147483647
      %v958 = vand.u32 %v957, 65535
      %v959 = vshra.s32 %v957, 16
      %v960 = vcvt.s32.f32 %v958
      %v961 = vcvt.s32.f32 %v959
      %962 = vmin.xlane.f32.xlu0 %v961
      %v963 = vpop.xlane.xlu0 %962
      %vm964 = vcmp.eq.f32.partialorder %v961, %v963
      %v965 = vsel %vm964, %v960, inf
      %966 = vmin.xlane.f32.xlu0 %v965
      %v967 = vpop.xlane.xlu0 %966
      %v968 = vcvt.f32.s32 %v967
      %v969 = vcvt.f32.s32 %v963
      %v970 = vshll.u32 %v969, 16
      %v971 = vadd.s32 %v970, %v968
      %v972 = vsel %vm480, %v844, 2147483647
      %v973 = vand.u32 %v972, 65535
      %v974 = vshra.s32 %v972, 16
      %v975 = vcvt.s32.f32 %v973
      %v976 = vcvt.s32.f32 %v974
      %977 = vmin.xlane.f32.xlu0 %v976
      %v978 = vpop.xlane.xlu0 %977
      %vm979 = vcmp.eq.f32.partialorder %v976, %v978
      %v980 = vsel %vm979, %v975, inf
      %981 = vmin.xlane.f32.xlu0 %v980
      %v982 = vpop.xlane.xlu0 %981
      %v983 = vcvt.f32.s32 %v982
      %v984 = vcvt.f32.s32 %v978
      %v985 = vshll.u32 %v984, 16
      %v986 = vadd.s32 %v985, %v983
      %v987 = vsel %vm480, %v845, 2147483647
      %v988 = vand.u32 %v987, 65535
      %v989 = vshra.s32 %v987, 16
      %v990 = vcvt.s32.f32 %v988
      %v991 = vcvt.s32.f32 %v989
      %992 = vmin.xlane.f32.xlu0 %v991
      %v993 = vpop.xlane.xlu0 %992
      %vm994 = vcmp.eq.f32.partialorder %v991, %v993
      %v995 = vsel %vm994, %v990, inf
      %996 = vmin.xlane.f32.xlu0 %v995
      %v997 = vpop.xlane.xlu0 %996
      %v998 = vcvt.f32.s32 %v997
      %v999 = vcvt.f32.s32 %v993
      %v1000 = vshll.u32 %v999, 16
      %v1001 = vadd.s32 %v1000, %v998
      %v1002 = vsel %vm480, %v846, 2147483647
      %v1003 = vand.u32 %v1002, 65535
      %v1004 = vshra.s32 %v1002, 16
      %v1005 = vcvt.s32.f32 %v1003
      %v1006 = vcvt.s32.f32 %v1004
      %1007 = vmin.xlane.f32.xlu0 %v1006
      %v1008 = vpop.xlane.xlu0 %1007
      %vm1009 = vcmp.eq.f32.partialorder %v1006, %v1008
      %v1010 = vsel %vm1009, %v1005, inf
      %1011 = vmin.xlane.f32.xlu0 %v1010
      %v1012 = vpop.xlane.xlu0 %1011
      %v1013 = vcvt.f32.s32 %v1012
      %v1014 = vcvt.f32.s32 %v1008
      %v1015 = vshll.u32 %v1014, 16
      %v1016 = vadd.s32 %v1015, %v1013
      %v1017 = vsel %vm480, %v847, 2147483647
      %v1018 = vand.u32 %v1017, 65535
      %v1019 = vshra.s32 %v1017, 16
      %v1020 = vcvt.s32.f32 %v1018
      %v1021 = vcvt.s32.f32 %v1019
      %1022 = vmin.xlane.f32.xlu0 %v1021
      %v1023 = vpop.xlane.xlu0 %1022
      %vm1024 = vcmp.eq.f32.partialorder %v1021, %v1023
      %v1025 = vsel %vm1024, %v1020, inf
      %1026 = vmin.xlane.f32.xlu0 %v1025
      %v1027 = vpop.xlane.xlu0 %1026
      %v1028 = vcvt.f32.s32 %v1027
      %v1029 = vcvt.f32.s32 %v1023
      %v1030 = vshll.u32 %v1029, 16
      %v1031 = vadd.s32 %v1030, %v1028
      %v1032 = vsel %vm480, %v848, 2147483647
      %v1033 = vand.u32 %v1032, 65535
      %v1034 = vshra.s32 %v1032, 16
      %v1035 = vcvt.s32.f32 %v1033
      %v1036 = vcvt.s32.f32 %v1034
      %1037 = vmin.xlane.f32.xlu0 %v1036
      %v1038 = vpop.xlane.xlu0 %1037
      %vm1039 = vcmp.eq.f32.partialorder %v1036, %v1038
      %v1040 = vsel %vm1039, %v1035, inf
      %1041 = vmin.xlane.f32.xlu0 %v1040
      %v1042 = vpop.xlane.xlu0 %1041
      %v1043 = vcvt.f32.s32 %v1042
      %v1044 = vcvt.f32.s32 %v1038
      %v1045 = vshll.u32 %v1044, 16
      %v1046 = vadd.s32 %v1045, %v1043
      %v1047 = vsel %vm480, %v849, 2147483647
      %v1048 = vand.u32 %v1047, 65535
      %v1049 = vshra.s32 %v1047, 16
      %v1050 = vcvt.s32.f32 %v1048
      %v1051 = vcvt.s32.f32 %v1049
      %1052 = vmin.xlane.f32.xlu0 %v1051
      %v1053 = vpop.xlane.xlu0 %1052
      %vm1054 = vcmp.eq.f32.partialorder %v1051, %v1053
      %v1055 = vsel %vm1054, %v1050, inf
      %1056 = vmin.xlane.f32.xlu0 %v1055
      %v1057 = vpop.xlane.xlu0 %1056
      %v1058 = vcvt.f32.s32 %v1057
      %v1059 = vcvt.f32.s32 %v1053
      %v1060 = vshll.u32 %v1059, 16
      %v1061 = vadd.s32 %v1060, %v1058
      %v1062 = vsel %vm480, %v850, 2147483647
      %v1063 = vand.u32 %v1062, 65535
      %v1064 = vshra.s32 %v1062, 16
      %v1065 = vcvt.s32.f32 %v1063
      %v1066 = vcvt.s32.f32 %v1064
      %1067 = vmin.xlane.f32.xlu0 %v1066
      %v1068 = vpop.xlane.xlu0 %1067
      %vm1069 = vcmp.eq.f32.partialorder %v1066, %v1068
      %v1070 = vsel %vm1069, %v1065, inf
      %1071 = vmin.xlane.f32.xlu0 %v1070
      %v1072 = vpop.xlane.xlu0 %1071
      %v1073 = vcvt.f32.s32 %v1072
      %v1074 = vcvt.f32.s32 %v1068
      %v1075 = vshll.u32 %v1074, 16
      %v1076 = vadd.s32 %v1075, %v1073
      %v1077 = vsel %vm480, %v851, 2147483647
      %v1078 = vand.u32 %v1077, 65535
      %v1079 = vshra.s32 %v1077, 16
      %v1080 = vcvt.s32.f32 %v1078
      %v1081 = vcvt.s32.f32 %v1079
      %1082 = vmin.xlane.f32.xlu0 %v1081
      %v1083 = vpop.xlane.xlu0 %1082
      %vm1084 = vcmp.eq.f32.partialorder %v1081, %v1083
      %v1085 = vsel %vm1084, %v1080, inf
      %1086 = vmin.xlane.f32.xlu0 %v1085
      %v1087 = vpop.xlane.xlu0 %1086
      %v1088 = vcvt.f32.s32 %v1087
      %v1089 = vcvt.f32.s32 %v1083
      %v1090 = vshll.u32 %v1089, 16
      %v1091 = vadd.s32 %v1090, %v1088
      %1092 = vst.msk [vmem:[%s247] sm:$0xff] %vm801, %v866
      %1093 = vst.msk [vmem:[%s247 + $0x8] sm:$0xff] %vm801, %v881
      %1094 = vst.msk [vmem:[%s247 + $0x10] sm:$0xff] %vm801, %v896
      %1095 = vst.msk [vmem:[%s247 + $0x18] sm:$0xff] %vm801, %v911
      %1096 = vst.msk [vmem:[%s247 + $0x20] sm:$0xff] %vm801, %v926
      %1097 = vst.msk [vmem:[%s247 + $0x28] sm:$0xff] %vm801, %v941
      %1098 = vst.msk [vmem:[%s247 + $0x30] sm:$0xff] %vm801, %v956
      %1099 = vst.msk [vmem:[%s247 + $0x38] sm:$0xff] %vm801, %v971
      %1100 = vst.msk [vmem:[%s247 + $0x40] sm:$0xff] %vm801, %v986
      %1101 = vst.msk [vmem:[%s247 + $0x48] sm:$0xff] %vm801, %v1001
      %1102 = vst.msk [vmem:[%s247 + $0x50] sm:$0xff] %vm801, %v1016
      %1103 = vst.msk [vmem:[%s247 + $0x58] sm:$0xff] %vm801, %v1031
      %1104 = vst.msk [vmem:[%s247 + $0x60] sm:$0xff] %vm801, %v1046
      %1105 = vst.msk [vmem:[%s247 + $0x68] sm:$0xff] %vm801, %v1061
      %1106 = vst.msk [vmem:[%s247 + $0x70] sm:$0xff] %vm801, %v1076
      %1107 = vst.msk [vmem:[%s247 + $0x78] sm:$0xff] %vm801, %v1091
      %1108 = vst.msk [vmem:[%s241] sm:$0xff] %vm480, %v673
      %1109 = vst.msk [vmem:[%s241 + $0x8] sm:$0xff] %vm480, %v674
      %1110 = vst.msk [vmem:[%s241 + $0x10] sm:$0xff] %vm480, %v675
      %1111 = vst.msk [vmem:[%s241 + $0x18] sm:$0xff] %vm480, %v676
      %1112 = vst.msk [vmem:[%s241 + $0x20] sm:$0xff] %vm480, %v677
      %1113 = vst.msk [vmem:[%s241 + $0x28] sm:$0xff] %vm480, %v678
      %1114 = vst.msk [vmem:[%s241 + $0x30] sm:$0xff] %vm480, %v679
      %1115 = vst.msk [vmem:[%s241 + $0x38] sm:$0xff] %vm480, %v680
      %1116 = vst.msk [vmem:[%s241 + $0x40] sm:$0xff] %vm480, %v681
      %1117 = vst.msk [vmem:[%s241 + $0x48] sm:$0xff] %vm480, %v682
      %1118 = vst.msk [vmem:[%s241 + $0x50] sm:$0xff] %vm480, %v683
      %1119 = vst.msk [vmem:[%s241 + $0x58] sm:$0xff] %vm480, %v684
      %1120 = vst.msk [vmem:[%s241 + $0x60] sm:$0xff] %vm480, %v685
      %1121 = vst.msk [vmem:[%s241 + $0x68] sm:$0xff] %vm480, %v686
      %1122 = vst.msk [vmem:[%s241 + $0x70] sm:$0xff] %vm480, %v687
      %1123 = vst.msk [vmem:[%s241 + $0x78] sm:$0xff] %vm480, %v688
      %1140 = vrot.lane.b32.xlu0 %v690, 16
      %v1141 = vpop.permute.xlu0 %1140
      %1142 = vrot.lane.b32.xlu0 %v692, 16
      %v1143 = vpop.permute.xlu0 %1142
      %1144 = vrot.lane.b32.xlu0 %v694, 16
      %v1145 = vpop.permute.xlu0 %1144
      %1146 = vrot.lane.b32.xlu0 %v696, 16
      %v1147 = vpop.permute.xlu0 %1146
      %1148 = vrot.lane.b32.xlu0 %v698, 16
      %v1149 = vpop.permute.xlu0 %1148
      %1150 = vrot.lane.b32.xlu0 %v700, 16
      %v1151 = vpop.permute.xlu0 %1150
      %1152 = vrot.lane.b32.xlu0 %v702, 16
      %v1153 = vpop.permute.xlu0 %1152
      %1154 = vrot.lane.b32.xlu0 %v704, 16
      %v1155 = vpop.permute.xlu0 %1154
      %1156 = vrot.lane.b32.xlu0 %v706, 16
      %v1157 = vpop.permute.xlu0 %1156
      %1158 = vrot.lane.b32.xlu0 %v708, 16
      %v1159 = vpop.permute.xlu0 %1158
      %1160 = vrot.lane.b32.xlu0 %v710, 16
      %v1161 = vpop.permute.xlu0 %1160
      %1162 = vrot.lane.b32.xlu0 %v712, 16
      %v1163 = vpop.permute.xlu0 %1162
      %1164 = vrot.lane.b32.xlu0 %v714, 16
      %v1165 = vpop.permute.xlu0 %1164
      %1166 = vrot.lane.b32.xlu0 %v716, 16
      %v1167 = vpop.permute.xlu0 %1166
      %1168 = vrot.lane.b32.xlu0 %v718, 16
      %v1169 = vpop.permute.xlu0 %1168
      %1170 = vrot.lane.b32.xlu0 %v720, 16
      %v1171 = vpop.permute.xlu0 %1170
      %vm1188 = vcmask 261248
      %1189 = vst.msk [vmem:[%s241] sm:$0xff] %vm1188, %v1141
      %1190 = vst.msk [vmem:[%s241 + $0x8] sm:$0xff] %vm1188, %v1143
      %1191 = vst.msk [vmem:[%s241 + $0x10] sm:$0xff] %vm1188, %v1145
      %1192 = vst.msk [vmem:[%s241 + $0x18] sm:$0xff] %vm1188, %v1147
      %1193 = vst.msk [vmem:[%s241 + $0x20] sm:$0xff] %vm1188, %v1149
      %1194 = vst.msk [vmem:[%s241 + $0x28] sm:$0xff] %vm1188, %v1151
      %1195 = vst.msk [vmem:[%s241 + $0x30] sm:$0xff] %vm1188, %v1153
      %1196 = vst.msk [vmem:[%s241 + $0x38] sm:$0xff] %vm1188, %v1155
      %1197 = vst.msk [vmem:[%s241 + $0x40] sm:$0xff] %vm1188, %v1157
      %1198 = vst.msk [vmem:[%s241 + $0x48] sm:$0xff] %vm1188, %v1159
      %1199 = vst.msk [vmem:[%s241 + $0x50] sm:$0xff] %vm1188, %v1161
      %1200 = vst.msk [vmem:[%s241 + $0x58] sm:$0xff] %vm1188, %v1163
      %1201 = vst.msk [vmem:[%s241 + $0x60] sm:$0xff] %vm1188, %v1165
      %1202 = vst.msk [vmem:[%s241 + $0x68] sm:$0xff] %vm1188, %v1167
      %1203 = vst.msk [vmem:[%s241 + $0x70] sm:$0xff] %vm1188, %v1169
      %1204 = vst.msk [vmem:[%s241 + $0x78] sm:$0xff] %vm1188, %v1171
      %s1205 = smul.u32 16, %s17
      %p1206 = scmp.lt.s32.totalorder %s1205, 31
      %s1207 = scalar_select %p1206, %s1205, 31
      %s1208 = smul.addr %s1207, 8
      %s1209 = scalar_lea.vmem %s3, %s1208
      %s1210 = smul.u32 16, %s17
      %p1211 = scmp.lt.s32.totalorder %s1210, 31
      %s1212 = scalar_select %p1211, %s1210, 31
      %s1213 = smul.addr %s1212, 8
      %s1214 = scalar_lea.vmem %s4, %s1213
      %s1215 = smul.u32 16, %s17
      %p1216 = scmp.lt.s32.totalorder %s1215, 31
      %s1217 = scalar_select %p1216, %s1215, 31
      %s1218 = smul.addr %s1217, 8
      %s1219 = scalar_lea.vmem %s5, %s1218
      // Predicated region
      $region33: #{categorical_forward.1} parent=31 // pred_check
        %p1220 = pneg %p103
      $region34: #{categorical_forward.1} parent=31 // pred_check_branch
        %1222 = sbr.rel (%p1220) target = $region36
      $region35: #{categorical_forward.1} parent=31 // pred_region
        %s1223 = smul.u32 16, %s17
      $region36: #{categorical_forward.1} parent=31 // pred_fallthru
        _
      // Predicated region
      $region37: #{categorical_forward.1} parent=31 // pred_check
        %p1224 = pneg %p129
      $region38: #{categorical_forward.1} parent=31 // pred_check_branch
        %1226 = sbr.rel (%p1224) target = $region40
      $region39: #{categorical_forward.1} parent=31 // pred_region
        %s1227 = smul.u32 16, %s17
      $region40: #{categorical_forward.1} parent=31 // pred_fallthru
        _
      // Predicated region
      $region41: #{categorical_forward.1} parent=31 // pred_check
        %p1228 = pneg %p155
      $region42: #{categorical_forward.1} parent=31 // pred_check_branch
        %1230 = sbr.rel (%p1228) target = $region44
      $region43: #{categorical_forward.1} parent=31 // pred_region
        %s1231 = smul.u32 16, %s17
      $region44: #{categorical_forward.1} parent=31 // pred_fallthru
        _
    $region32: #{categorical_forward.1} parent=5 // pred_fallthru
      _
    %p1232 = scmp.le.s32.totalorder 2, %s12
    // Predicated region
    $region45: #{categorical_forward.1} parent=5 // pred_check
      %p1233 = pneg %p1232
    $region46: #{categorical_forward.1} parent=5 // pred_check_branch
      %1235 = sbr.rel (%p1233) target = $region48
    $region47: #{categorical_forward.1} parent=5 // pred_region
      %s1236 = ssub.s32 %s12, 2
      // Predicated region
      $region49: #{categorical_forward.1} parent=47 // pred_check
        %p1237 = pneg %p109
      $region50: #{categorical_forward.1} parent=47 // pred_check_branch
        %1239 = sbr.rel (%p1237) target = $region52
      $region51: #{categorical_forward.1} parent=47 // pred_region
        %s1240 = smul.u32 16, %s18
        %p1241 = scmp.lt.s32.totalorder %s1240, 31
        %s1242 = scalar_select %p1241, %s1240, 31
        %s1243 = smul.addr %s1242, 8
        %s1244 = scalar_lea.vmem %s3, %s1243
      $region52: #{categorical_forward.1} parent=47 // pred_fallthru
        _
      // Predicated region
      $region53: #{categorical_forward.1} parent=47 // pred_check
        %p1245 = pneg %p135
      $region54: #{categorical_forward.1} parent=47 // pred_check_branch
        %1247 = sbr.rel (%p1245) target = $region56
      $region55: #{categorical_forward.1} parent=47 // pred_region
        %s1248 = smul.u32 16, %s18
        %p1249 = scmp.lt.s32.totalorder %s1248, 31
        %s1250 = scalar_select %p1249, %s1248, 31
        %s1251 = smul.addr %s1250, 8
        %s1252 = scalar_lea.vmem %s4, %s1251
      $region56: #{categorical_forward.1} parent=47 // pred_fallthru
        _
      // Predicated region
      $region57: #{categorical_forward.1} parent=47 // pred_check
        %p1253 = pneg %p161
      $region58: #{categorical_forward.1} parent=47 // pred_check_branch
        %1255 = sbr.rel (%p1253) target = $region60
      $region59: #{categorical_forward.1} parent=47 // pred_region
        %s1256 = smul.u32 16, %s18
        %p1257 = scmp.lt.s32.totalorder %s1256, 31
        %s1258 = scalar_select %p1257, %s1256, 31
        %s1259 = smul.addr %s1258, 8
        %s1260 = scalar_lea.vmem %s5, %s1259
      $region60: #{categorical_forward.1} parent=47 // pred_fallthru
        _
    $region48: #{categorical_forward.1} parent=5 // pred_fallthru
      _
  $region6: #{categorical_forward.1} parent=0 // loop_footer
    %s16 = sadd.s32 1, %s12
  $region7: #{categorical_forward.1} parent=0 // loop_footer_branch
    %11 = sbr.rel target = $region3
  $region8: #{categorical_forward.1} parent=0 // loop_exit
    _

</llo_original>
